<compile_context>
chip_gen: v7x
topology: tpu7x:2x2x1
jax: 0.10.0
libtpu: 0.0.40
codegen_flags: <defaults>
</compile_context>

<pallas_src>
import math
import functools

import jax
import jax.numpy as jnp
from jax import lax
from jax.experimental import pallas as pl
from jax.experimental.pallas import tpu as pltpu


# --------------------------------------------------------------------------
# generation-aware tiling
# --------------------------------------------------------------------------
def _device_kind():
    try:
        return jax.devices()[0].device_kind.lower()
    except Exception:
        return ""


def _fit_tile(L, target, candidates):
    """Largest candidate <= target that divides L; otherwise take the full L."""
    for c in candidates:
        if c <= target and L % c == 0:
            return c
    return L


def _pick_tiles(Lq, Lk):
    kind = _device_kind()
    if "v7" in kind:
        # 64 MiB VMEM (48 MiB budget): modest q tiles, but keep full-width
        # K tiles — the flash path only needs ~1-2 MiB per step, and shrinking
        # tk just doubles the ki trip count and starves the 256x256 MXU.
        tq_t, tk_t = 256, 512
    else:
        # v5e / v6e: K/V are re-streamed from HBM once per q tile, so a large
        # q tile is the lever that pushes the kernel from HBM-bound to
        # MXU-bound (ridge ~240 flops/byte on v5e, ~650 on v6e).
        tq_t, tk_t = 512, 512
    tq = _fit_tile(Lq, tq_t, (512, 256, 128, 64, 32, 16, 8))
    # k tiles stay lane-aligned (multiples of 128) unless Lk fits in one step
    tk = _fit_tile(Lk, tk_t, (512, 256, 128))
    return tq, tk


def _vmem_limit_bytes():
    kind = _device_kind()
    if "v7" in kind:
        return 48 * 1024 * 1024     # headroom inside 64 MiB physical VMEM
    return 96 * 1024 * 1024         # v5e / v6e: 128 MiB physical


def _kv_block_spec(tk, D):
    idx = lambda bh, qi, ki: (bh, ki, 0)
    if "v5" in _device_kind():
        # v5e has the lowest HBM BW; a third K/V buffer (~one extra (tk, D)
        # tile) hides more of the fetch latency. Neutral on v6e/v7x.
        try:
            return pl.BlockSpec((1, tk, D), idx, pipeline_mode=pl.Buffered(3))
        except (TypeError, AttributeError):
            pass
    return pl.BlockSpec((1, tk, D), idx)


# --------------------------------------------------------------------------
# kernel
# --------------------------------------------------------------------------
def _flash_sdpa_kernel(q_ref, k_ref, v_ref, out_ref, *rest,
                       scale, n_k, tk, return_attn):
    if return_attn:
        attn_ref, m_scr, l_scr, acc_scr, mhist_scr = rest
    else:
        m_scr, l_scr, acc_scr = rest

    ki = pl.program_id(2)

    @pl.when(ki == 0)
    def _init():
        m_scr[...] = jnp.full(m_scr.shape, -jnp.inf, dtype=m_scr.dtype)
        l_scr[...] = jnp.zeros(l_scr.shape, dtype=l_scr.dtype)
        acc_scr[...] = jnp.zeros(acc_scr.shape, dtype=acc_scr.dtype)

    # Pre-scale q (tq*D mults) instead of the (tq, tk) score tile; stays in the
    # input dtype so the MXU still sees bf16 when the inputs are bf16.
    q = (q_ref[0] * scale).astype(q_ref.dtype)      # (tq, D)
    k = k_ref[0]                                    # (tk, D)
    v = v_ref[0]                                    # (tk, D)

    # scores = (q / temperature) @ k^T  -- contract last dims, no K transpose.
    s = lax.dot_general(q, k, dimension_numbers=(((1,), (1,)), ((), ())),
                        preferred_element_type=jnp.float32)       # (tq, tk) f32

    # online softmax update (all f32)
    m_prev = m_scr[...]
    m_new = jnp.maximum(m_prev, jnp.max(s, axis=-1, keepdims=True))
    alpha = jnp.exp(m_prev - m_new)
    p = jnp.exp(s - m_new)                                        # (tq, tk) f32

    l_scr[...] = alpha * l_scr[...] + jnp.sum(p, axis=-1, keepdims=True)
    acc_scr[...] = alpha * acc_scr[...] + jnp.dot(
        p.astype(v.dtype), v, preferred_element_type=jnp.float32)
    m_scr[...] = m_new

    if return_attn:
        # The attn output block is VMEM-resident across the ki axis, so stash
        # the unnormalized tile directly into it (no (n_k, tq, tk) scratch);
        # it is rescaled in place at the final step.
        if n_k == 1:
            attn_ref[0] = p.astype(attn_ref.dtype)
        else:
            off = pl.multiple_of(ki * tk, tk)       # tk is a multiple of 128 here
            attn_ref[0, :, pl.ds(off, tk)] = p.astype(attn_ref.dtype)
        mhist_scr[ki] = m_new                       # running max p was taken against

    @pl.when(ki == n_k - 1)
    def _finalize():
        l = l_scr[...]
        inv_l = pl.reciprocal(l, approx=True)                      # EUP vrcp, O path
        out_ref[0] = (acc_scr[...] * inv_l).astype(out_ref.dtype)
        if return_attn:
            m_fin = m_scr[...]
            inv_l_exact = 1.0 / l                   # exact: returned rows sum to 1
            for j in range(n_k):                    # static unroll -> static lane slices
                corr = jnp.exp(mhist_scr[j] - m_fin) * inv_l_exact  # (tq, 1) f32
                blk = attn_ref[0, :, j * tk:(j + 1) * tk].astype(jnp.float32)
                attn_ref[0, :, j * tk:(j + 1) * tk] = (blk * corr).astype(attn_ref.dtype)


# --------------------------------------------------------------------------
# wrapper
# --------------------------------------------------------------------------
def scaled_dot_product_attention(q, k, v, temperature, *, return_attn=True):
    """q, k, v: [B, H, L, D]. Returns (output, attn) or just output."""
    B, H, Lq, D = q.shape
    Lk = k.shape[2]
    assert k.shape == (B, H, Lk, D) and v.shape == (B, H, Lk, D)

    BH = B * H
    qf = q.reshape(BH, Lq, D)
    kf = k.reshape(BH, Lk, D)
    vf = v.reshape(BH, Lk, D)

    tq, tk = _pick_tiles(Lq, Lk)
    n_q, n_k = Lq // tq, Lk // tk
    # TODO(synk): temperature must be a static / concrete scalar here; a traced
    #             temperature would need to be passed as a kernel operand.
    scale = 1.0 / float(temperature)

    kernel = functools.partial(_flash_sdpa_kernel, scale=scale, n_k=n_k, tk=tk,
                               return_attn=return_attn)

    q_spec = pl.BlockSpec((1, tq, D), lambda bh, qi, ki: (bh, qi, 0))
    k_spec = _kv_block_spec(tk, D)
    v_spec = _kv_block_spec(tk, D)
    o_spec = pl.BlockSpec((1, tq, D), lambda bh, qi, ki: (bh, qi, 0))

    scratch = [
        pltpu.VMEM((tq, 1), jnp.float32),     # running max m
        pltpu.VMEM((tq, 1), jnp.float32),     # running denom l
        pltpu.VMEM((tq, D), jnp.float32),     # output accumulator
    ]

    if return_attn:
        a_spec = pl.BlockSpec((1, tq, Lk), lambda bh, qi, ki: (bh, qi, 0))
        out_shape = (jax.ShapeDtypeStruct((BH, Lq, D), q.dtype),
                     jax.ShapeDtypeStruct((BH, Lq, Lk), q.dtype))
        out_specs = (o_spec, a_spec)
        scratch += [pltpu.VMEM((n_k, tq, 1), jnp.float32)]   # per-tile running max m_j
    else:
        out_shape = jax.ShapeDtypeStruct((BH, Lq, D), q.dtype)
        out_specs = o_spec

    result = pl.pallas_call(
        kernel,
        out_shape=out_shape,
        grid_spec=pltpu.PrefetchScalarGridSpec(
            num_scalar_prefetch=0,
            grid=(BH, n_q, n_k),
            in_specs=[q_spec, k_spec, v_spec],
            out_specs=out_specs,
            scratch_shapes=scratch),
        compiler_params=pltpu.CompilerParams(
            dimension_semantics=("parallel", "parallel", "arbitrary"),
            vmem_limit_bytes=_vmem_limit_bytes()),
    )(qf, kf, vf)

    if return_attn:
        out, attn = result
        return out.reshape(B, H, Lq, D), attn.reshape(B, H, Lq, Lk)
    return result.reshape(B, H, Lq, D)


# --------------------------------------------------------------------------
# reference + demo
# --------------------------------------------------------------------------
def _reference(q, k, v, temperature):
    qf = q.astype(jnp.float32)
    kf = k.astype(jnp.float32)
    vf = v.astype(jnp.float32)
    scores = jnp.einsum("bhqd,bhkd->bhqk", qf / temperature, kf)
    attn = jax.nn.softmax(scores, axis=-1)
    out = jnp.einsum("bhqk,bhkd->bhqd", attn, vf)
    return out, attn


if __name__ == "__main__":
    # --- small shapes consistent with the module's 4-D q/k/v forward -------
    B, H, L, D = 2, 2, 8, 32
    temperature = math.sqrt(D)

    key = jax.random.PRNGKey(0)
    kq, kk, kv = jax.random.split(key, 3)
    q = jax.random.normal(kq, (B, H, L, D), dtype=jnp.float32)
    k = jax.random.normal(kk, (B, H, L, D), dtype=jnp.float32)
    v = jax.random.normal(kv, (B, H, L, D), dtype=jnp.float32)

    out, attn = scaled_dot_product_attention(q, k, v, temperature)
    out = jax.block_until_ready(out)
    attn = jax.block_until_ready(attn)

    out_ref, attn_ref = _reference(q, k, v, temperature)
    # tolerance on the output accounts for the approx (EUP) reciprocal
    assert jnp.allclose(out, out_ref, atol=2e-3, rtol=2e-3), "output mismatch"
    assert jnp.allclose(attn, attn_ref, atol=2e-3, rtol=2e-3), "attn mismatch"

    # --- bf16, multi-tile (exercises the tiled online-softmax path + the
    #     in-place attn_ref staging/rescale across multiple ki steps) --------
    B2, H2, L2, D2 = 1, 1, 1024, 64
    temperature2 = math.sqrt(D2)
    kq2, kk2, kv2 = jax.random.split(jax.random.PRNGKey(0), 3)
    q2 = jax.random.normal(kq2, (B2, H2, L2, D2), dtype=jnp.bfloat16)
    k2 = jax.random.normal(kk2, (B2, H2, L2, D2), dtype=jnp.bfloat16)
    v2 = jax.random.normal(kv2, (B2, H2, L2, D2), dtype=jnp.bfloat16)

    out2, attn2 = scaled_dot_product_attention(q2, k2, v2, temperature2)
    out2 = jax.block_until_ready(out2)
    attn2 = jax.block_until_ready(attn2)
    out2_ref, attn2_ref = _reference(q2, k2, v2, temperature2)
    assert jnp.allclose(out2.astype(jnp.float32), out2_ref,
                        atol=2e-2, rtol=2e-2), "bf16 output mismatch"
    assert jnp.allclose(attn2.astype(jnp.float32), attn2_ref,
                        atol=1e-2, rtol=2e-2), "bf16 attn mismatch"

    # --- output-only (pure flash, no O(L^2) attention write) ---------------
    out3 = scaled_dot_product_attention(q2, k2, v2, temperature2,
                                        return_attn=False)
    out3 = jax.block_until_ready(out3)
    assert jnp.allclose(out3.astype(jnp.float32), out2_ref,
                        atol=2e-2, rtol=2e-2), "flash-only output mismatch"

    print("KERNEL_OK")
</pallas_src>

<mosaic_0001>
module attributes {stable_mosaic.version = 11 : i64} {
  func.func @_flash_sdpa_kernel(%arg0: i32, %arg1: i32, %arg2: i32, %arg3: memref<1x8x32xf32, #tpu.memory_space<vmem>>, %arg4: memref<1x8x32xf32, #tpu.memory_space<vmem>>, %arg5: memref<1x8x32xf32, #tpu.memory_space<vmem>>, %arg6: memref<1x8x32xf32, #tpu.memory_space<vmem>>, %arg7: memref<1x8x8xf32, #tpu.memory_space<vmem>>, %arg8: memref<8x1xf32, #tpu.memory_space<vmem>>, %arg9: memref<8x1xf32, #tpu.memory_space<vmem>>, %arg10: memref<8x32xf32, #tpu.memory_space<vmem>>, %arg11: memref<1x8x1xf32, #tpu.memory_space<vmem>>) attributes {dimension_semantics = [#tpu.dimension_semantics<parallel>, #tpu.dimension_semantics<parallel>, #tpu.dimension_semantics<arbitrary>], iteration_bounds = array<i64: 4, 1, 1>, scalar_prefetch = 0 : i64, scratch_operands = 4 : i64, tpu.core_type = #tpu.core_type<tc>, window_params = [{transform_indices = @transform_0, window_bounds = array<i64: 1, 8, 32>}, {transform_indices = @transform_1, window_bounds = array<i64: 1, 8, 32>}, {transform_indices = @transform_2, window_bounds = array<i64: 1, 8, 32>}, {transform_indices = @transform_3, window_bounds = array<i64: 1, 8, 32>}, {transform_indices = @transform_4, window_bounds = array<i64: 1, 8, 8>}]} {
    %c0_i32 = arith.constant 0 : i32
    %0 = arith.cmpi eq, %arg2, %c0_i32 : i32
    %1 = arith.extui %0 : i1 to i32
    %c0_i32_0 = arith.constant 0 : i32
    %2 = arith.cmpi ne, %1, %c0_i32_0 : i32
    scf.if %2 {
      %cst_32 = arith.constant 0xFF800000 : f32
      %44 = vector.broadcast %cst_32 : f32 to vector<8x1xf32>
      %c0_33 = arith.constant 0 : index
      %c0_34 = arith.constant 0 : index
      %45 = vector.load %arg8[%c0_33, %c0_34] : memref<8x1xf32, #tpu.memory_space<vmem>>, vector<8x1xf32>
      tpu.vector_store %arg8[%c0_33, %c0_34], %44 {strides = array<i32>} : memref<8x1xf32, #tpu.memory_space<vmem>>, vector<8x1xf32>,
      %cst_35 = arith.constant 0.000000e+00 : f32
      %46 = vector.broadcast %cst_35 : f32 to vector<8x1xf32>
      %c0_36 = arith.constant 0 : index
      %c0_37 = arith.constant 0 : index
      %47 = vector.load %arg9[%c0_36, %c0_37] : memref<8x1xf32, #tpu.memory_space<vmem>>, vector<8x1xf32>
      tpu.vector_store %arg9[%c0_36, %c0_37], %46 {strides = array<i32>} : memref<8x1xf32, #tpu.memory_space<vmem>>, vector<8x1xf32>,
      %cst_38 = arith.constant 0.000000e+00 : f32
      %48 = vector.broadcast %cst_38 : f32 to vector<8x32xf32>
      %c0_39 = arith.constant 0 : index
      %c0_40 = arith.constant 0 : index
      %49 = vector.load %arg10[%c0_39, %c0_40] : memref<8x32xf32, #tpu.memory_space<vmem>>, vector<8x32xf32>
      tpu.vector_store %arg10[%c0_39, %c0_40], %48 {strides = array<i32>} : memref<8x32xf32, #tpu.memory_space<vmem>>, vector<8x32xf32>,
    } else {
    }
    %c0 = arith.constant 0 : index
    %c0_1 = arith.constant 0 : index
    %c0_2 = arith.constant 0 : index
    %3 = vector.load %arg3[%c0, %c0_1, %c0_2] : memref<1x8x32xf32, #tpu.memory_space<vmem>>, vector<1x8x32xf32>
    %4 = vector.shape_cast %3 : vector<1x8x32xf32> to vector<8x32xf32>
    %cst = arith.constant 0.176776692 : f32
    %5 = vector.broadcast %cst : f32 to vector<8x32xf32>
    %6 = arith.mulf %4, %5 : vector<8x32xf32>
    %c0_3 = arith.constant 0 : index
    %c0_4 = arith.constant 0 : index
    %c0_5 = arith.constant 0 : index
    %7 = vector.load %arg4[%c0_3, %c0_4, %c0_5] : memref<1x8x32xf32, #tpu.memory_space<vmem>>, vector<1x8x32xf32>
    %8 = vector.shape_cast %7 : vector<1x8x32xf32> to vector<8x32xf32>
    %c0_6 = arith.constant 0 : index
    %c0_7 = arith.constant 0 : index
    %c0_8 = arith.constant 0 : index
    %9 = vector.load %arg5[%c0_6, %c0_7, %c0_8] : memref<1x8x32xf32, #tpu.memory_space<vmem>>, vector<1x8x32xf32>
    %10 = vector.shape_cast %9 : vector<1x8x32xf32> to vector<8x32xf32>
    %cst_9 = arith.constant dense<0.000000e+00> : vector<8x8xf32>
    %11 = tpu.matmul %6, %8, %cst_9 {dimension_numbers = #tpu.dot_dimension_numbers<[1], [1], [0], [0], [0, 0, 1, 0], [], []>} : vector<8x32xf32>, vector<8x32xf32>, vector<8x8xf32> -> vector<8x8xf32>
    %c0_10 = arith.constant 0 : index
    %c0_11 = arith.constant 0 : index
    %12 = vector.load %arg8[%c0_10, %c0_11] : memref<8x1xf32, #tpu.memory_space<vmem>>, vector<8x1xf32>
    %cst_12 = arith.constant dense<0xFF800000> : vector<8xf32>
    %13 = vector.multi_reduction <maximumf>, %11, %cst_12 [1] : vector<8x8xf32> to vector<8xf32>
    %14 = vector.shape_cast %13 : vector<8xf32> to vector<8x1xf32>
    %15 = arith.maximumf %12, %14 : vector<8x1xf32>
    %16 = arith.subf %12, %15 : vector<8x1xf32>
    %17 = math.exp %16 : vector<8x1xf32>
    %18 = vector.broadcast %15 : vector<8x1xf32> to vector<8x8xf32>
    %19 = arith.subf %11, %18 : vector<8x8xf32>
    %20 = math.exp %19 : vector<8x8xf32>
    %c0_13 = arith.constant 0 : index
    %c0_14 = arith.constant 0 : index
    %21 = vector.load %arg9[%c0_13, %c0_14] : memref<8x1xf32, #tpu.memory_space<vmem>>, vector<8x1xf32>
    %22 = arith.mulf %17, %21 : vector<8x1xf32>
    %cst_15 = arith.constant dense<0.000000e+00> : vector<8xf32>
    %23 = vector.multi_reduction <add>, %20, %cst_15 [1] : vector<8x8xf32> to vector<8xf32>
    %24 = vector.shape_cast %23 : vector<8xf32> to vector<8x1xf32>
    %25 = arith.addf %22, %24 : vector<8x1xf32>
    %c0_16 = arith.constant 0 : index
    %c0_17 = arith.constant 0 : index
    %26 = vector.load %arg9[%c0_16, %c0_17] : memref<8x1xf32, #tpu.memory_space<vmem>>, vector<8x1xf32>
    tpu.vector_store %arg9[%c0_16, %c0_17], %25 {strides = array<i32>} : memref<8x1xf32, #tpu.memory_space<vmem>>, vector<8x1xf32>,
    %c0_18 = arith.constant 0 : index
    %c0_19 = arith.constant 0 : index
    %27 = vector.load %arg10[%c0_18, %c0_19] : memref<8x32xf32, #tpu.memory_space<vmem>>, vector<8x32xf32>
    %28 = vector.broadcast %17 : vector<8x1xf32> to vector<8x32xf32>
    %29 = arith.mulf %28, %27 : vector<8x32xf32>
    %cst_20 = arith.constant dense<0.000000e+00> : vector<8x32xf32>
    %30 = tpu.matmul %20, %10, %cst_20 {dimension_numbers = #tpu.dot_dimension_numbers<[1], [0], [0], [1], [0, 0, 1, 1], [], []>} : vector<8x8xf32>, vector<8x32xf32>, vector<8x32xf32> -> vector<8x32xf32>
    %31 = arith.addf %29, %30 : vector<8x32xf32>
    %c0_21 = arith.constant 0 : index
    %c0_22 = arith.constant 0 : index
    %32 = vector.load %arg10[%c0_21, %c0_22] : memref<8x32xf32, #tpu.memory_space<vmem>>, vector<8x32xf32>
    tpu.vector_store %arg10[%c0_21, %c0_22], %31 {strides = array<i32>} : memref<8x32xf32, #tpu.memory_space<vmem>>, vector<8x32xf32>,
    %c0_23 = arith.constant 0 : index
    %c0_24 = arith.constant 0 : index
    %33 = vector.load %arg8[%c0_23, %c0_24] : memref<8x1xf32, #tpu.memory_space<vmem>>, vector<8x1xf32>
    tpu.vector_store %arg8[%c0_23, %c0_24], %15 {strides = array<i32>} : memref<8x1xf32, #tpu.memory_space<vmem>>, vector<8x1xf32>,
    %c0_25 = arith.constant 0 : index
    %c0_26 = arith.constant 0 : index
    %c0_27 = arith.constant 0 : index
    %34 = vector.load %arg7[%c0_25, %c0_26, %c0_27] : memref<1x8x8xf32, #tpu.memory_space<vmem>>, vector<1x8x8xf32>
    %35 = vector.shape_cast %34 : vector<1x8x8xf32> to vector<8x8xf32>
    %36 = vector.shape_cast %20 : vector<8x8xf32> to vector<1x8x8xf32>
    tpu.vector_store %arg7[%c0_25, %c0_26, %c0_27], %36 {strides = array<i32>} : memref<1x8x8xf32, #tpu.memory_space<vmem>>, vector<1x8x8xf32>,
    %37 = arith.index_cast %arg2 : i32 to index
    %c0_28 = arith.constant 0 : index
    %c0_29 = arith.constant 0 : index
    %38 = vector.load %arg11[%37, %c0_28, %c0_29] : memref<1x8x1xf32, #tpu.memory_space<vmem>>, vector<1x8x1xf32>
    %39 = vector.shape_cast %38 : vector<1x8x1xf32> to vector<8x1xf32>
    %40 = vector.shape_cast %15 : vector<8x1xf32> to vector<1x8x1xf32>
    tpu.vector_store %arg11[%37, %c0_28, %c0_29], %40 {strides = array<i32>} : memref<1x8x1xf32, #tpu.memory_space<vmem>>, vector<1x8x1xf32>,
    %c0_i32_30 = arith.constant 0 : i32
    %41 = arith.cmpi eq, %arg2, %c0_i32_30 : i32
    %42 = arith.extui %41 : i1 to i32
    %c0_i32_31 = arith.constant 0 : i32
    %43 = arith.cmpi ne, %42, %c0_i32_31 : i32
    scf.if %43 {
      %c0_32 = arith.constant 0 : index
      %c0_33 = arith.constant 0 : index
      %44 = vector.load %arg9[%c0_32, %c0_33] : memref<8x1xf32, #tpu.memory_space<vmem>>, vector<8x1xf32>
      %45 = tpu.reciprocal %44 {approx = true} : vector<8x1xf32> -> vector<8x1xf32>
      %c0_34 = arith.constant 0 : index
      %c0_35 = arith.constant 0 : index
      %46 = vector.load %arg10[%c0_34, %c0_35] : memref<8x32xf32, #tpu.memory_space<vmem>>, vector<8x32xf32>
      %47 = vector.broadcast %45 : vector<8x1xf32> to vector<8x32xf32>
      %48 = arith.mulf %46, %47 : vector<8x32xf32>
      %c0_36 = arith.constant 0 : index
      %c0_37 = arith.constant 0 : index
      %c0_38 = arith.constant 0 : index
      %49 = vector.load %arg6[%c0_36, %c0_37, %c0_38] : memref<1x8x32xf32, #tpu.memory_space<vmem>>, vector<1x8x32xf32>
      %50 = vector.shape_cast %49 : vector<1x8x32xf32> to vector<8x32xf32>
      %51 = vector.shape_cast %48 : vector<8x32xf32> to vector<1x8x32xf32>
      tpu.vector_store %arg6[%c0_36, %c0_37, %c0_38], %51 {strides = array<i32>} : memref<1x8x32xf32, #tpu.memory_space<vmem>>, vector<1x8x32xf32>,
      %c0_39 = arith.constant 0 : index
      %c0_40 = arith.constant 0 : index
      %52 = vector.load %arg8[%c0_39, %c0_40] : memref<8x1xf32, #tpu.memory_space<vmem>>, vector<8x1xf32>
      %cst_41 = arith.constant 1.000000e+00 : f32
      %53 = vector.broadcast %cst_41 : f32 to vector<8x1xf32>
      %54 = arith.divf %53, %44 : vector<8x1xf32>
      %c0_42 = arith.constant 0 : index
      %c0_43 = arith.constant 0 : index
      %c0_44 = arith.constant 0 : index
      %55 = vector.load %arg11[%c0_42, %c0_43, %c0_44] : memref<1x8x1xf32, #tpu.memory_space<vmem>>, vector<1x8x1xf32>
      %56 = vector.shape_cast %55 : vector<1x8x1xf32> to vector<8x1xf32>
      %57 = arith.subf %56, %52 : vector<8x1xf32>
      %58 = math.exp %57 : vector<8x1xf32>
      %59 = arith.mulf %58, %54 : vector<8x1xf32>
      %c0_45 = arith.constant 0 : index
      %c0_46 = arith.constant 0 : index
      %c0_47 = arith.constant 0 : index
      %60 = vector.load %arg7[%c0_45, %c0_46, %c0_47] : memref<1x8x8xf32, #tpu.memory_space<vmem>>, vector<1x8x8xf32>
      %61 = vector.shape_cast %60 : vector<1x8x8xf32> to vector<8x8xf32>
      %62 = vector.broadcast %59 : vector<8x1xf32> to vector<8x8xf32>
      %63 = arith.mulf %61, %62 : vector<8x8xf32>
      %c0_48 = arith.constant 0 : index
      %c0_49 = arith.constant 0 : index
      %c0_50 = arith.constant 0 : index
      %64 = vector.load %arg7[%c0_48, %c0_49, %c0_50] : memref<1x8x8xf32, #tpu.memory_space<vmem>>, vector<1x8x8xf32>
      %65 = vector.shape_cast %64 : vector<1x8x8xf32> to vector<8x8xf32>
      %66 = vector.shape_cast %63 : vector<8x8xf32> to vector<1x8x8xf32>
      tpu.vector_store %arg7[%c0_48, %c0_49, %c0_50], %66 {strides = array<i32>} : memref<1x8x8xf32, #tpu.memory_space<vmem>>, vector<1x8x8xf32>,
    } else {
    }
    return
  }
  func.func @transform_0(%arg0: i32, %arg1: i32, %arg2: i32) -> (i32, i32, i32) {
    %c0_i32 = arith.constant 0 : i32
    %c0_i32_0 = arith.constant 0 : i32
    return %arg0, %arg1, %c0_i32 : i32, i32, i32
  }
  func.func @transform_1(%arg0: i32, %arg1: i32, %arg2: i32) -> (i32, i32, i32) {
    %c0_i32 = arith.constant 0 : i32
    %c0_i32_0 = arith.constant 0 : i32
    return %arg0, %arg2, %c0_i32 : i32, i32, i32
  }
  func.func @transform_2(%arg0: i32, %arg1: i32, %arg2: i32) -> (i32, i32, i32) {
    %c0_i32 = arith.constant 0 : i32
    %c0_i32_0 = arith.constant 0 : i32
    return %arg0, %arg2, %c0_i32 : i32, i32, i32
  }
  func.func @transform_3(%arg0: i32, %arg1: i32, %arg2: i32) -> (i32, i32, i32) {
    %c0_i32 = arith.constant 0 : i32
    %c0_i32_0 = arith.constant 0 : i32
    return %arg0, %arg1, %c0_i32 : i32, i32, i32
  }
  func.func @transform_4(%arg0: i32, %arg1: i32, %arg2: i32) -> (i32, i32, i32) {
    %c0_i32 = arith.constant 0 : i32
    %c0_i32_0 = arith.constant 0 : i32
    return %arg0, %arg1, %c0_i32 : i32, i32, i32
  }
}

</mosaic_0001>

<llo_original>
// kernel: tpu_custom_call.1
$region0: #{tpu_custom_call.1}
  #allocation0 [shape = 'u32[]', space=smem, size = 0x4, offset = 0x4, fixed_abs, tag = 'smem constant byte address 0x4 - core index']
  #allocation1 [shape = 'u32[144,128]{1,0:T(1,128)}', space=vmem, size = 0x12000, scoped, tag = 'internal scratch']
  #allocation2 [shape = 'f32[8,1]{1,0:T(8,128)}', space=vmem, size = 0x1000, scoped, tag = 'scratch operand']
  #allocation3 [shape = 'f32[8,1]{1,0:T(8,128)}', space=vmem, size = 0x1000, scoped, tag = 'scratch operand']
  #allocation4 [shape = 'f32[8,32]{1,0:T(8,128)}', space=vmem, size = 0x1000, scoped, tag = 'scratch operand']
  #allocation5 [shape = 'f32[1,8,1]{2,1,0:T(8,128)}', space=vmem, size = 0x1000, scoped, tag = 'scratch operand']
  %s0 = inlined_call_operand.hbm [shape: f32[4,8,32], index: 0, kind: input, shape index: {}]
  %s1 = inlined_call_operand.hbm [shape: f32[4,8,32], index: 1, kind: input, shape index: {}]
  %s2 = inlined_call_operand.hbm [shape: f32[4,8,32], index: 2, kind: input, shape index: {}]
  %s3 = inlined_call_operand.hbm [shape: f32[4,8,32], index: 3, kind: output, shape index: {0}]
  %s4 = inlined_call_operand.hbm [shape: f32[4,8,8], index: 4, kind: output, shape index: {1}]
  %5 = xla_tuple %s3, %s4
  %s6 = sld [smem:[#allocation0]]
  $region73: #{tpu_custom_call.1} parent=0
    _
  %s8 = ssub.s32 1, %s6
  %s9 = scalar_select 0, %s8, %s6
  $region1: #{tpu_custom_call.1} parent=0
    #allocation6 [shape = 'u8[8192]{0}', space=vmem, size = 0x2000, scoped, tag = 'input window, operand 0']
    #allocation7 [shape = 's32[2]{0}', space=sflag, size = 0x8, scoped, tag = 'scoped memory for tpu_custom_call.1']
    #allocation8 [shape = 's32[2]{0}', space=sflag, size = 0x8, scoped, tag = 'scoped memory for tpu_custom_call.1']
    #allocation9 [shape = 'u8[8192]{0}', space=vmem, size = 0x2000, scoped, tag = 'input window, operand 1']
    #allocation10 [shape = 's32[2]{0}', space=sflag, size = 0x8, scoped, tag = 'scoped memory for tpu_custom_call.1']
    #allocation11 [shape = 'u8[8192]{0}', space=vmem, size = 0x2000, scoped, tag = 'input window, operand 2']
    #allocation12 [shape = 'u8[8192]{0}', space=vmem, size = 0x2000, scoped, tag = 'output window, operand 0']
    #allocation13 [shape = 'u8[8192]{0}', space=vmem, size = 0x2000, scoped, tag = 'output window, operand 1']
    #allocation14 [shape = 's32[2]{0}', space=sflag, size = 0x8, scoped, tag = 'scoped memory for tpu_custom_call.1']
    %10 = vsyncpa [#allocation7], 0
    %s11 = scalar_lea.sflag [#allocation7], 1
    %12 = vsyncpa %s11, 0
    %13 = vsyncpa [#allocation10], 0
    %s14 = scalar_lea.sflag [#allocation10], 1
    %15 = vsyncpa %s14, 0
    %16 = vsyncpa [#allocation8], 0
    %s17 = scalar_lea.sflag [#allocation8], 1
    %18 = vsyncpa %s17, 0
    %19 = vsyncpa [#allocation14], 0
    %s20 = scalar_lea.sflag [#allocation14], 1
    %21 = vsyncpa %s20, 0
    loop: start=0, step=1, limit=6
    $region2: #{tpu_custom_call.1} parent=1 // loop_pre_header
      _
    $region3: #{tpu_custom_call.1} parent=1 // loop_header
      %s23 = sphi 0, %s27
      %p24 = scmp.ge.s32.totalorder %s23, 6
      %s30 = sphi 0, %s49
      %s31 = sphi 0, %s45
      %s32 = sphi 0, %s41
      %s33 = sphi 0, %s30
      %s34 = sphi 0, %s31
      %s35 = sphi 0, %s32
      %s36 = sphi 0, %s33
      %s37 = sphi 0, %s34
      %s38 = sphi 0, %s35
      %s54 = sphi 0, %s56
      %s57 = sphi 0, %s54
      %s58 = sphi 0, %s57
      %s74 = sphi 0, %s58
      %s82 = sphi 0, %s84
      %s85 = sphi 0, %s82
      %s86 = sphi 0, %s85
      %s102 = sphi 0, %s86
      %s110 = sphi 0, %s112
      %s113 = sphi 0, %s110
      %s114 = sphi 0, %s113
      %s130 = sphi 0, %s114
      %s138 = sphi 0, %s140
      %s141 = sphi 0, %s138
      %s142 = sphi 0, %s141
      %s158 = sphi 0, %s142
      %s166 = sphi 0, %s168
      %s169 = sphi 0, %s166
      %s170 = sphi 0, %s169
      %s186 = sphi 0, %s170
    $region4: #{tpu_custom_call.1} parent=1 // loop_header_branch
      %26 = sbr.rel (%p24) target = $region8
    $region5: #{tpu_custom_call.1} parent=1 // loop_body
      %s28 = ssub.s32 %s23, 1
      %s29 = ssub.s32 %s23, 2
      %s39 = sadd.s32 1, %s32
      %p40 = scmp.ge.s32.totalorder %s39, 1
      %s41 = scalar_select %p40, 0, %s39
      %s42 = sadd.s32 1, %s31
      %s43 = scalar_select %p40, %s42, %s31
      %p44 = scmp.ge.s32.totalorder %s43, 1
      %s45 = scalar_select %p44, 0, %s43
      %s46 = sadd.s32 1, %s30
      %s47 = scalar_select %p44, %s46, %s30
      %p48 = scmp.ge.s32.totalorder %s47, 4
      %s49 = scalar_select %p48, 0, %s47
      %s50 = ssub.s32 %s30, %s49
      %s51 = ssub.s32 %s31, %s45
      %s52 = sor.u32 %s50, %s51
      %p53 = scmp.eq.s32.totalorder %s52, 0
      %s55 = sadd.s32 %s54, 1
      %s56 = scalar_select %p53, %s54, %s55
      %p59 = pneg %p53
      %p60 = scmp.eq.s32.totalorder %s23, 3
      %p61 = por %p59, %p60
      %p62 = scmp.ne.s32.totalorder %s54, %s57
      %p63 = scmp.eq.s32.totalorder %s23, 0
      %p64 = por %p62, %p63
      %p65 = scmp.ne.s32.totalorder %s54, %s57
      %p66 = scmp.eq.s32.totalorder %s28, 3
      %p67 = por %p65, %p66
      %p68 = scmp.ne.s32.totalorder %s57, %s58
      %p69 = scmp.eq.s32.totalorder %s28, 0
      %p70 = por %p68, %p69
      %p71 = scmp.ne.s32.totalorder %s57, %s58
      %p72 = scmp.eq.s32.totalorder %s29, 3
      %p73 = por %p71, %p72
      %p75 = scmp.ne.s32.totalorder %s58, %s74
      %p76 = scmp.eq.s32.totalorder %s29, 0
      %p77 = por %p75, %p76
      %s78 = ssub.s32 %s30, %s49
      %s79 = ssub.s32 %s32, %s41
      %s80 = sor.u32 %s78, %s79
      %p81 = scmp.eq.s32.totalorder %s80, 0
      %s83 = sadd.s32 %s82, 1
      %s84 = scalar_select %p81, %s82, %s83
      %p87 = pneg %p81
      %p88 = scmp.eq.s32.totalorder %s23, 3
      %p89 = por %p87, %p88
      %p90 = scmp.ne.s32.totalorder %s82, %s85
      %p91 = scmp.eq.s32.totalorder %s23, 0
      %p92 = por %p90, %p91
      %p93 = scmp.ne.s32.totalorder %s82, %s85
      %p94 = scmp.eq.s32.totalorder %s28, 3
      %p95 = por %p93, %p94
      %p96 = scmp.ne.s32.totalorder %s85, %s86
      %p97 = scmp.eq.s32.totalorder %s28, 0
      %p98 = por %p96, %p97
      %p99 = scmp.ne.s32.totalorder %s85, %s86
      %p100 = scmp.eq.s32.totalorder %s29, 3
      %p101 = por %p99, %p100
      %p103 = scmp.ne.s32.totalorder %s86, %s102
      %p104 = scmp.eq.s32.totalorder %s29, 0
      %p105 = por %p103, %p104
      %s106 = ssub.s32 %s30, %s49
      %s107 = ssub.s32 %s32, %s41
      %s108 = sor.u32 %s106, %s107
      %p109 = scmp.eq.s32.totalorder %s108, 0
      %s111 = sadd.s32 %s110, 1
      %s112 = scalar_select %p109, %s110, %s111
      %p115 = pneg %p109
      %p116 = scmp.eq.s32.totalorder %s23, 3
      %p117 = por %p115, %p116
      %p118 = scmp.ne.s32.totalorder %s110, %s113
      %p119 = scmp.eq.s32.totalorder %s23, 0
      %p120 = por %p118, %p119
      %p121 = scmp.ne.s32.totalorder %s110, %s113
      %p122 = scmp.eq.s32.totalorder %s28, 3
      %p123 = por %p121, %p122
      %p124 = scmp.ne.s32.totalorder %s113, %s114
      %p125 = scmp.eq.s32.totalorder %s28, 0
      %p126 = por %p124, %p125
      %p127 = scmp.ne.s32.totalorder %s113, %s114
      %p128 = scmp.eq.s32.totalorder %s29, 3
      %p129 = por %p127, %p128
      %p131 = scmp.ne.s32.totalorder %s114, %s130
      %p132 = scmp.eq.s32.totalorder %s29, 0
      %p133 = por %p131, %p132
      %s134 = ssub.s32 %s30, %s49
      %s135 = ssub.s32 %s31, %s45
      %s136 = sor.u32 %s134, %s135
      %p137 = scmp.eq.s32.totalorder %s136, 0
      %s139 = sadd.s32 %s138, 1
      %s140 = scalar_select %p137, %s138, %s139
      %p143 = pneg %p137
      %p144 = scmp.eq.s32.totalorder %s23, 3
      %p145 = por %p143, %p144
      %p146 = scmp.ne.s32.totalorder %s138, %s141
      %p147 = scmp.eq.s32.totalorder %s23, 0
      %p148 = por %p146, %p147
      %p149 = scmp.ne.s32.totalorder %s138, %s141
      %p150 = scmp.eq.s32.totalorder %s28, 3
      %p151 = por %p149, %p150
      %p152 = scmp.ne.s32.totalorder %s141, %s142
      %p153 = scmp.eq.s32.totalorder %s28, 0
      %p154 = por %p152, %p153
      %p155 = scmp.ne.s32.totalorder %s141, %s142
      %p156 = scmp.eq.s32.totalorder %s29, 3
      %p157 = por %p155, %p156
      %p159 = scmp.ne.s32.totalorder %s142, %s158
      %p160 = scmp.eq.s32.totalorder %s29, 0
      %p161 = por %p159, %p160
      %s162 = ssub.s32 %s30, %s49
      %s163 = ssub.s32 %s31, %s45
      %s164 = sor.u32 %s162, %s163
      %p165 = scmp.eq.s32.totalorder %s164, 0
      %s167 = sadd.s32 %s166, 1
      %s168 = scalar_select %p165, %s166, %s167
      %p171 = pneg %p165
      %p172 = scmp.eq.s32.totalorder %s23, 3
      %p173 = por %p171, %p172
      %p174 = scmp.ne.s32.totalorder %s166, %s169
      %p175 = scmp.eq.s32.totalorder %s23, 0
      %p176 = por %p174, %p175
      %p177 = scmp.ne.s32.totalorder %s166, %s169
      %p178 = scmp.eq.s32.totalorder %s28, 3
      %p179 = por %p177, %p178
      %p180 = scmp.ne.s32.totalorder %s169, %s170
      %p181 = scmp.eq.s32.totalorder %s28, 0
      %p182 = por %p180, %p181
      %p183 = scmp.ne.s32.totalorder %s169, %s170
      %p184 = scmp.eq.s32.totalorder %s29, 3
      %p185 = por %p183, %p184
      %p187 = scmp.ne.s32.totalorder %s170, %s186
      %p188 = scmp.eq.s32.totalorder %s29, 0
      %p189 = por %p187, %p188
      %p190 = scmp.le.s32.totalorder 1, %s23
      %p191 = scmp.lt.s32.totalorder %s23, 5
      %p192 = pnand %p190, %p191
      %p193 = pneg %p192
      // Predicated region
      $region9: #{tpu_custom_call.1} parent=5 // pred_check
        _
      $region10: #{tpu_custom_call.1} parent=5 // pred_check_branch
        %195 = sbr.rel (%p192) target = $region12
      $region11: #{tpu_custom_call.1} parent=5 // pred_region
        %s196 = ssub.s32 %s23, 1
      $region12: #{tpu_custom_call.1} parent=5 // pred_fallthru
        _
      %p197 = scmp.lt.s32.totalorder %s23, 4
      // Predicated region
      $region13: #{tpu_custom_call.1} parent=5 // pred_check
        %p198 = pneg %p197
      $region14: #{tpu_custom_call.1} parent=5 // pred_check_branch
        %200 = sbr.rel (%p198) target = $region16
      $region15: #{tpu_custom_call.1} parent=5 // pred_region
        // Predicated region
        $region17: #{tpu_custom_call.1} parent=15 // pred_check
          %p201 = pneg %p64
        $region18: #{tpu_custom_call.1} parent=15 // pred_check_branch
          %203 = sbr.rel (%p201) target = $region20
        $region19: #{tpu_custom_call.1} parent=15 // pred_region
          %s204 = sand.u32 %s54, 1
          %s205 = scalar_lea.sflag [#allocation7], %s204
          %s206 = sand.u32 %s54, 1
          %s207 = smul.addr %s206, 8
          %s208 = scalar_lea.vmem [#allocation6], %s207
          %s210 = ssub.s32 128, 128
          %211 = vsyncadd %s205, %s210
          %s212 = sadd.s32 %s31, %s30
          %s213 = smul.addr %s212, 128
          %s214 = scalar_lea.hbm %s0, %s213
          %s216 = sshll.u32 %s208, 4
          %s217 = int_to_ptr.vmem [resolvable:$true] %s216
          %219 = dma.hbm_to_vmem [thread:$0]  %s214, 128, %s217, %s205
        $region20: #{tpu_custom_call.1} parent=15 // pred_fallthru
          _
        // Predicated region
        $region21: #{tpu_custom_call.1} parent=15 // pred_check
          %p220 = pneg %p92
        $region22: #{tpu_custom_call.1} parent=15 // pred_check_branch
          %222 = sbr.rel (%p220) target = $region24
        $region23: #{tpu_custom_call.1} parent=15 // pred_region
          %s223 = sand.u32 %s23, 1
          %s224 = scalar_lea.sflag [#allocation10], %s223
          %s225 = sand.u32 %s82, 1
          %s226 = smul.addr %s225, 8
          %s227 = scalar_lea.vmem [#allocation9], %s226
          %s229 = ssub.s32 128, 128
          %230 = vsyncadd %s224, %s229
          %s231 = sadd.s32 %s32, %s30
          %s232 = smul.addr %s231, 128
          %s233 = scalar_lea.hbm %s1, %s232
          %s235 = sshll.u32 %s227, 4
          %s236 = int_to_ptr.vmem [resolvable:$true] %s235
          %238 = dma.hbm_to_vmem [thread:$0]  %s233, 128, %s236, %s224
        $region24: #{tpu_custom_call.1} parent=15 // pred_fallthru
          _
        // Predicated region
        $region25: #{tpu_custom_call.1} parent=15 // pred_check
          %p239 = pneg %p120
        $region26: #{tpu_custom_call.1} parent=15 // pred_check_branch
          %241 = sbr.rel (%p239) target = $region28
        $region27: #{tpu_custom_call.1} parent=15 // pred_region
          %s242 = sand.u32 %s23, 1
          %s243 = scalar_lea.sflag [#allocation10], %s242
          %s244 = sand.u32 %s110, 1
          %s245 = smul.addr %s244, 8
          %s246 = scalar_lea.vmem [#allocation11], %s245
          %s248 = ssub.s32 128, 128
          %249 = vsyncadd %s243, %s248
          %s250 = sadd.s32 %s32, %s30
          %s251 = smul.addr %s250, 128
          %s252 = scalar_lea.hbm %s2, %s251
          %s254 = sshll.u32 %s246, 4
          %s255 = int_to_ptr.vmem [resolvable:$true] %s254
          %257 = dma.hbm_to_vmem [thread:$0]  %s252, 128, %s255, %s243
        $region28: #{tpu_custom_call.1} parent=15 // pred_fallthru
          _
      $region16: #{tpu_custom_call.1} parent=5 // pred_fallthru
        _
      %p258 = scmp.le.s32.totalorder 1, %s23
      %p259 = scmp.lt.s32.totalorder %s23, 5
      %p260 = pnand %p258, %p259
      %p261 = pneg %p260
      // Predicated region
      $region29: #{tpu_custom_call.1} parent=5 // pred_check
        _
      $region30: #{tpu_custom_call.1} parent=5 // pred_check_branch
        %263 = sbr.rel (%p260) target = $region32
      $region31: #{tpu_custom_call.1} parent=5 // pred_region
        %s264 = ssub.s32 %s23, 1
        %s265 = sand.u32 %s57, 1
        %s266 = scalar_lea.sflag [#allocation7], %s265
        %s267 = sand.u32 %s57, 1
        %s268 = smul.addr %s267, 8
        %s269 = scalar_lea.vmem [#allocation6], %s268
        // Predicated region
        $region33: #{tpu_custom_call.1} parent=31 // pred_check
          %p270 = pneg %p70
        $region34: #{tpu_custom_call.1} parent=31 // pred_check_branch
          %272 = sbr.rel (%p270) target = $region36
        $region35: #{tpu_custom_call.1} parent=31 // pred_region
          %273 = dma.done %s266, 128
        $region36: #{tpu_custom_call.1} parent=31 // pred_fallthru
          _
        %s274 = sand.u32 %s28, 1
        %s275 = scalar_lea.sflag [#allocation10], %s274
        %s276 = sand.u32 %s85, 1
        %s277 = smul.addr %s276, 8
        %s278 = scalar_lea.vmem [#allocation9], %s277
        // Predicated region
        $region37: #{tpu_custom_call.1} parent=31 // pred_check
          %p279 = pneg %p98
        $region38: #{tpu_custom_call.1} parent=31 // pred_check_branch
          %281 = sbr.rel (%p279) target = $region40
        $region39: #{tpu_custom_call.1} parent=31 // pred_region
          %282 = dma.done %s275, 128
        $region40: #{tpu_custom_call.1} parent=31 // pred_fallthru
          _
        %s283 = sand.u32 %s28, 1
        %s284 = scalar_lea.sflag [#allocation10], %s283
        %s285 = sand.u32 %s113, 1
        %s286 = smul.addr %s285, 8
        %s287 = scalar_lea.vmem [#allocation11], %s286
        // Predicated region
        $region41: #{tpu_custom_call.1} parent=31 // pred_check
          %p288 = pneg %p126
        $region42: #{tpu_custom_call.1} parent=31 // pred_check_branch
          %290 = sbr.rel (%p288) target = $region44
        $region43: #{tpu_custom_call.1} parent=31 // pred_region
          %291 = dma.done %s284, 128
        $region44: #{tpu_custom_call.1} parent=31 // pred_fallthru
          _
        %s292 = sand.u32 %s57, 1
        %s293 = scalar_lea.sflag [#allocation7], %s292
        %s294 = sand.u32 %s57, 1
        %s295 = smul.addr %s294, 8
        %s296 = scalar_lea.vmem [#allocation6], %s295
        %p297 = pneg %p70
        %p298 = pneg %p67
        %s299 = sand.u32 %s28, 1
        %s300 = scalar_lea.sflag [#allocation10], %s299
        %s301 = sand.u32 %s85, 1
        %s302 = smul.addr %s301, 8
        %s303 = scalar_lea.vmem [#allocation9], %s302
        %p304 = pneg %p98
        %p305 = pneg %p95
        %s306 = sand.u32 %s28, 1
        %s307 = scalar_lea.sflag [#allocation10], %s306
        %s308 = sand.u32 %s113, 1
        %s309 = smul.addr %s308, 8
        %s310 = scalar_lea.vmem [#allocation11], %s309
        %p311 = pneg %p126
        %p312 = pneg %p123
        %p313 = pneg %p154
        %p314 = pneg %p151
        %s315 = sand.u32 %s141, 1
        %s316 = scalar_lea.sflag [#allocation8], %s315
        %s317 = sand.u32 %s141, 1
        %s318 = smul.addr %s317, 8
        %s319 = scalar_lea.vmem [#allocation12], %s318
        %p320 = pneg %p182
        %p321 = pneg %p179
        %s322 = sand.u32 %s169, 1
        %s323 = scalar_lea.sflag [#allocation14], %s322
        %s324 = sand.u32 %s169, 1
        %s325 = smul.addr %s324, 8
        %s326 = scalar_lea.vmem [#allocation13], %s325
        %p327 = scmp.eq.s32.totalorder %s35, 0
        // Predicated region
        $region45: #{tpu_custom_call.1} parent=31 // pred_check
          %p328 = pneg %p327
        $region46: #{tpu_custom_call.1} parent=31 // pred_check_branch
          %330 = sbr.rel (%p328) target = $region48
        $region47: #{tpu_custom_call.1} parent=31 // pred_region
          %vm331 = vcmask 7168
          %332 = vst.msk [vmem:[#allocation2] sm:$0xff] %vm331, -inf
          %333 = vst.msk [vmem:[#allocation3] sm:$0xff] %vm331, 0.0
          %vm334 = vcmask 261120
          %335 = vst.msk [vmem:[#allocation4] sm:$0xff] %vm334, 0.0
        $region48: #{tpu_custom_call.1} parent=31 // pred_fallthru
          _
        %v336 = vld [vmem:[%s269] sm:$0xff]
        %v337 = vmul.f32 %v336, 0.17677669
        %v338 = vld [vmem:[%s278] sm:$0xff]
        %v339 = vld [vmem:[%s287] sm:$0xff]
        %vm340 = vcmask 261120
        %v342 = vsel %vm340, %v337, 0
        %v345 = vsel %vm340, %v338, 0
        %347 = vmatprep.subr.mxu0 0.0
        %348 = vmatpush1.xpose.msra.mxu0 %v345
        %349 = vmatprep.subr.mxu0 0.0
        %350 = vmatpush1.xpose.msra.mxu0 0.0
        %351 = vmatprep.subr.mxu0 0.0
        %352 = vmatpush1.xpose.msra.mxu0 0.0
        %353 = vmatprep.subr.mxu0 0.0
        %354 = vmatpush1.xpose.msra.mxu0 0.0
        %355 = vmatprep.subr.mxu0 0.0
        %356 = vmatpush1.xpose.msra.mxu0 0.0
        %357 = vmatprep.subr.mxu0 0.0
        %358 = vmatpush1.xpose.msra.mxu0 0.0
        %359 = vmatprep.subr.mxu0 0.0
        %360 = vmatpush1.xpose.msra.mxu0 0.0
        %361 = vmatprep.subr.mxu0 0.0
        %362 = vmatpush1.xpose.msra.mxu0 0.0
        %363 = vmatprep.subr.mxu0 0.0
        %364 = vmatpush1.xpose.msra.mxu0 0.0
        %365 = vmatprep.subr.mxu0 0.0
        %366 = vmatpush1.xpose.msra.mxu0 0.0
        %367 = vmatprep.subr.mxu0 0.0
        %368 = vmatpush1.xpose.msra.mxu0 0.0
        %369 = vmatprep.subr.mxu0 0.0
        %370 = vmatpush1.xpose.msra.mxu0 0.0
        %371 = vmatprep.subr.mxu0 0.0
        %372 = vmatpush1.xpose.msra.mxu0 0.0
        %373 = vmatprep.subr.mxu0 0.0
        %374 = vmatpush1.xpose.msra.mxu0 0.0
        %375 = vmatprep.subr.mxu0 0.0
        %376 = vmatpush1.xpose.msra.mxu0 0.0
        %377 = vmatprep.subr.mxu0 0.0
        %378 = vmatpush1.xpose.msra.mxu0 0.0
        %379 = vmatprep.subr.mxu0 0.0
        %380 = vmatpush1.xpose.msra.mxu0 0.0
        %381 = vmatprep.subr.mxu0 0.0
        %382 = vmatpush1.xpose.msra.mxu0 0.0
        %383 = vmatprep.subr.mxu0 0.0
        %384 = vmatpush1.xpose.msra.mxu0 0.0
        %385 = vmatprep.subr.mxu0 0.0
        %386 = vmatpush1.xpose.msra.mxu0 0.0
        %387 = vmatprep.subr.mxu0 0.0
        %388 = vmatpush1.xpose.msra.mxu0 0.0
        %389 = vmatprep.subr.mxu0 0.0
        %390 = vmatpush1.xpose.msra.mxu0 0.0
        %391 = vmatprep.subr.mxu0 0.0
        %392 = vmatpush1.xpose.msra.mxu0 0.0
        %393 = vmatprep.subr.mxu0 0.0
        %394 = vmatpush1.xpose.msra.mxu0 0.0
        %395 = vmatprep.subr.mxu0 0.0
        %396 = vmatpush1.xpose.msra.mxu0 0.0
        %397 = vmatprep.subr.mxu0 0.0
        %398 = vmatpush1.xpose.msra.mxu0 0.0
        %399 = vmatprep.subr.mxu0 0.0
        %400 = vmatpush1.xpose.msra.mxu0 0.0
        %401 = vmatprep.subr.mxu0 0.0
        %402 = vmatpush1.xpose.msra.mxu0 0.0
        %403 = vmatprep.subr.mxu0 0.0
        %404 = vmatpush1.xpose.msra.mxu0 0.0
        %405 = vmatprep.subr.mxu0 0.0
        %406 = vmatpush1.xpose.msra.mxu0 0.0
        %407 = vmatprep.subr.mxu0 0.0
        %408 = vmatpush1.xpose.msra.mxu0 0.0
        %409 = vmatprep.subr.mxu0 0.0
        %410 = vmatpush1.xpose.msra.mxu0 0.0
        %411 = vmatprep.mubr.f32.mxu0 0.0
        %412 = vmatmul.mubr.f32.gmra.mrb[0].mxu0 %v342
        %v413 = vpop.f32.mrb[0].mxu0
        %v414 = vadd.f32 0.0, %v413
        %v415 = vpop.f32.mrb[0].mxu0
        %416 = vdwg.mxu0
        %v417 = vld [vmem:[#allocation2] sm:$0xff]
        %vm418 = vcmask 64512
        %v419 = vsel %vm418, %v414, -inf
        %420 = vmax.xlane.f32.xlu0 %v419
        %v421 = vpop.xlane.xlu0 %420
        %v422 = vmax.f32 %v417, %v421
        %v423 = vsub.f32 %v417, %v422
        %v424 = vmul.f32 %v423, 1.442695
        %v425 = vpow.pop %v424
        %427 = vset.pattern.permute.xlu0 0
        %428 = vperm.xlu0 %427, %v422
        %v429 = vpop.permute.xlu0 %428
        %v431 = vsub.f32 %v414, %v429
        %v432 = vmul.f32 %v431, 1.442695
        %v433 = vpow.pop %v432
        %v434 = vld [vmem:[#allocation3] sm:$0xff]
        %v435 = vmul.f32 %v425, %v434
        %v436 = vsel %vm418, %v433, 0.0
        %437 = vadd.xlane.f32.xlu0 %v436
        %v438 = vpop.xlane.xlu0 %437
        %v439 = vadd.f32 %v435, %v438
        %vm440 = vcmask 7168
        %441 = vst.msk [vmem:[#allocation3] sm:$0xff] %vm440, %v439
        %v442 = vld [vmem:[#allocation4] sm:$0xff]
        %444 = vset.pattern.permute.xlu0 0
        %445 = vperm.xlu0 %444, %v425
        %v446 = vpop.permute.xlu0 %445
        %v448 = vmul.f32 %v446, %v442
        %v450 = vsel %vm418, %v433, 0
        %452 = vmatprep.subr.mxu0 0.0
        %453 = vmatpush1.msra.mxu0 %v339
        %454 = vmatprep.subr.mxu0 0.0
        %455 = vmatpush1.msra.mxu0 0.0
        %456 = vmatprep.subr.mxu0 0.0
        %457 = vmatpush1.msra.mxu0 0.0
        %458 = vmatprep.subr.mxu0 0.0
        %459 = vmatpush1.msra.mxu0 0.0
        %460 = vmatprep.subr.mxu0 0.0
        %461 = vmatpush1.msra.mxu0 0.0
        %462 = vmatprep.subr.mxu0 0.0
        %463 = vmatpush1.msra.mxu0 0.0
        %464 = vmatprep.subr.mxu0 0.0
        %465 = vmatpush1.msra.mxu0 0.0
        %466 = vmatprep.subr.mxu0 0.0
        %467 = vmatpush1.msra.mxu0 0.0
        %468 = vmatprep.subr.mxu0 0.0
        %469 = vmatpush1.msra.mxu0 0.0
        %470 = vmatprep.subr.mxu0 0.0
        %471 = vmatpush1.msra.mxu0 0.0
        %472 = vmatprep.subr.mxu0 0.0
        %473 = vmatpush1.msra.mxu0 0.0
        %474 = vmatprep.subr.mxu0 0.0
        %475 = vmatpush1.msra.mxu0 0.0
        %476 = vmatprep.subr.mxu0 0.0
        %477 = vmatpush1.msra.mxu0 0.0
        %478 = vmatprep.subr.mxu0 0.0
        %479 = vmatpush1.msra.mxu0 0.0
        %480 = vmatprep.subr.mxu0 0.0
        %481 = vmatpush1.msra.mxu0 0.0
        %482 = vmatprep.subr.mxu0 0.0
        %483 = vmatpush1.msra.mxu0 0.0
        %484 = vmatprep.subr.mxu0 0.0
        %485 = vmatpush1.msra.mxu0 0.0
        %486 = vmatprep.subr.mxu0 0.0
        %487 = vmatpush1.msra.mxu0 0.0
        %488 = vmatprep.subr.mxu0 0.0
        %489 = vmatpush1.msra.mxu0 0.0
        %490 = vmatprep.subr.mxu0 0.0
        %491 = vmatpush1.msra.mxu0 0.0
        %492 = vmatprep.subr.mxu0 0.0
        %493 = vmatpush1.msra.mxu0 0.0
        %494 = vmatprep.subr.mxu0 0.0
        %495 = vmatpush1.msra.mxu0 0.0
        %496 = vmatprep.subr.mxu0 0.0
        %497 = vmatpush1.msra.mxu0 0.0
        %498 = vmatprep.subr.mxu0 0.0
        %499 = vmatpush1.msra.mxu0 0.0
        %500 = vmatprep.subr.mxu0 0.0
        %501 = vmatpush1.msra.mxu0 0.0
        %502 = vmatprep.subr.mxu0 0.0
        %503 = vmatpush1.msra.mxu0 0.0
        %504 = vmatprep.subr.mxu0 0.0
        %505 = vmatpush1.msra.mxu0 0.0
        %506 = vmatprep.subr.mxu0 0.0
        %507 = vmatpush1.msra.mxu0 0.0
        %508 = vmatprep.subr.mxu0 0.0
        %509 = vmatpush1.msra.mxu0 0.0
        %510 = vmatprep.subr.mxu0 0.0
        %511 = vmatpush1.msra.mxu0 0.0
        %512 = vmatprep.subr.mxu0 0.0
        %513 = vmatpush1.msra.mxu0 0.0
        %514 = vmatprep.subr.mxu0 0.0
        %515 = vmatpush1.msra.mxu0 0.0
        %516 = vmatprep.mubr.f32.mxu0 0.0
        %517 = vmatmul.mubr.f32.gmra.mrb[0].mxu0 %v450
        %v518 = vpop.f32.mrb[0].mxu0
        %v519 = vadd.f32 0.0, %v518
        %v520 = vpop.f32.mrb[0].mxu0
        %521 = vdwg.mxu0
        %v522 = vadd.f32 %v448, %v519
        %523 = vst.msk [vmem:[#allocation4] sm:$0xff] %vm340, %v522
        %524 = vst.msk [vmem:[#allocation2] sm:$0xff] %vm440, %v422
        %525 = vst.msk [vmem:[%s326] sm:$0xff] %vm418, %v433
        %s526 = smul.u32 %s35, 8
        %s527 = scalar_lea.vmem [#allocation5], %s526
        %528 = vst.msk [vmem:[%s527] sm:$0xff] %vm440, %v422
        // Predicated region
        $region49: #{tpu_custom_call.1} parent=31 // pred_check
          %p529 = pneg %p327
        $region50: #{tpu_custom_call.1} parent=31 // pred_check_branch
          %531 = sbr.rel (%p529) target = $region52
        $region51: #{tpu_custom_call.1} parent=31 // pred_region
          %v532 = vld [vmem:[#allocation3] sm:$0xff]
          %v533 = vrcp.pop %v532
          %v534 = vld [vmem:[#allocation4] sm:$0xff]
          %536 = vset.pattern.permute.xlu0 0
          %537 = vperm.xlu0 %536, %v533
          %v538 = vpop.permute.xlu0 %537
          %v540 = vmul.f32 %v534, %v538
          %541 = vst.msk [vmem:[%s319] sm:$0xff] %vm340, %v540
          %v542 = vld [vmem:[#allocation2] sm:$0xff]
          %v543 = vrcp.pop %v532
          %v544 = vmul.f32 1.0, %v543
          %v545 = vld [vmem:[#allocation5] sm:$0xff]
          %v546 = vsub.f32 %v545, %v542
          %v547 = vmul.f32 %v546, 1.442695
          %v548 = vpow.pop %v547
          %v549 = vmul.f32 %v548, %v544
          %v550 = vld [vmem:[%s326] sm:$0xff]
          %552 = vset.pattern.permute.xlu0 0
          %553 = vperm.xlu0 %552, %v549
          %v554 = vpop.permute.xlu0 %553
          %v556 = vmul.f32 %v550, %v554
          %557 = vst.msk [vmem:[%s326] sm:$0xff] %vm418, %v556
        $region52: #{tpu_custom_call.1} parent=31 // pred_fallthru
          _
        %s558 = sand.u32 %s141, 1
        %s559 = scalar_lea.sflag [#allocation8], %s558
        %s560 = sand.u32 %s141, 1
        %s561 = smul.addr %s560, 8
        %s562 = scalar_lea.vmem [#allocation12], %s561
        %s563 = sand.u32 %s169, 1
        %s564 = scalar_lea.sflag [#allocation14], %s563
        %s565 = sand.u32 %s169, 1
        %s566 = smul.addr %s565, 8
        %s567 = scalar_lea.vmem [#allocation13], %s566
        // Predicated region
        $region53: #{tpu_custom_call.1} parent=31 // pred_check
          %p568 = pneg %p151
        $region54: #{tpu_custom_call.1} parent=31 // pred_check_branch
          %570 = sbr.rel (%p568) target = $region56
        $region55: #{tpu_custom_call.1} parent=31 // pred_region
          %s572 = ssub.s32 128, 128
          %573 = vsyncadd %s559, %s572
          %s574 = sadd.s32 %s34, %s33
          %s575 = smul.addr %s574, 128
          %s576 = scalar_lea.hbm %s3, %s575
          %s578 = sshll.u32 %s562, 4
          %s579 = int_to_ptr.vmem [resolvable:$true] %s578
          %581 = dma.vmem_to_hbm [thread:$0]  %s579, 128, %s576, %s559
        $region56: #{tpu_custom_call.1} parent=31 // pred_fallthru
          _
        // Predicated region
        $region57: #{tpu_custom_call.1} parent=31 // pred_check
          %p582 = pneg %p179
        $region58: #{tpu_custom_call.1} parent=31 // pred_check_branch
          %584 = sbr.rel (%p582) target = $region60
        $region59: #{tpu_custom_call.1} parent=31 // pred_region
          %s586 = ssub.s32 128, 128
          %587 = vsyncadd %s564, %s586
          %s588 = sadd.s32 %s34, %s33
          %s589 = smul.addr %s588, 128
          %s590 = scalar_lea.hbm %s4, %s589
          %s592 = sshll.u32 %s567, 4
          %s593 = int_to_ptr.vmem [resolvable:$true] %s592
          %595 = dma.vmem_to_hbm [thread:$0]  %s593, 128, %s590, %s564
        $region60: #{tpu_custom_call.1} parent=31 // pred_fallthru
          _
      $region32: #{tpu_custom_call.1} parent=5 // pred_fallthru
        _
      %p596 = scmp.le.s32.totalorder 2, %s23
      // Predicated region
      $region61: #{tpu_custom_call.1} parent=5 // pred_check
        %p597 = pneg %p596
      $region62: #{tpu_custom_call.1} parent=5 // pred_check_branch
        %599 = sbr.rel (%p597) target = $region64
      $region63: #{tpu_custom_call.1} parent=5 // pred_region
        %s600 = ssub.s32 %s23, 2
        // Predicated region
        $region65: #{tpu_custom_call.1} parent=63 // pred_check
          %p601 = pneg %p157
        $region66: #{tpu_custom_call.1} parent=63 // pred_check_branch
          %603 = sbr.rel (%p601) target = $region68
        $region67: #{tpu_custom_call.1} parent=63 // pred_region
          %s604 = sand.u32 %s142, 1
          %s605 = scalar_lea.sflag [#allocation8], %s604
          %s606 = sand.u32 %s142, 1
          %s607 = smul.addr %s606, 8
          %s608 = scalar_lea.vmem [#allocation12], %s607
          %609 = dma.done %s605, 128
        $region68: #{tpu_custom_call.1} parent=63 // pred_fallthru
          _
        // Predicated region
        $region69: #{tpu_custom_call.1} parent=63 // pred_check
          %p610 = pneg %p185
        $region70: #{tpu_custom_call.1} parent=63 // pred_check_branch
          %612 = sbr.rel (%p610) target = $region72
        $region71: #{tpu_custom_call.1} parent=63 // pred_region
          %s613 = sand.u32 %s170, 1
          %s614 = scalar_lea.sflag [#allocation14], %s613
          %s615 = sand.u32 %s170, 1
          %s616 = smul.addr %s615, 8
          %s617 = scalar_lea.vmem [#allocation13], %s616
          %618 = dma.done %s614, 128
        $region72: #{tpu_custom_call.1} parent=63 // pred_fallthru
          _
      $region64: #{tpu_custom_call.1} parent=5 // pred_fallthru
        _
    $region6: #{tpu_custom_call.1} parent=1 // loop_footer
      %s27 = sadd.s32 1, %s23
    $region7: #{tpu_custom_call.1} parent=1 // loop_footer_branch
      %22 = sbr.rel target = $region3
    $region8: #{tpu_custom_call.1} parent=1 // loop_exit
      _
    %619 = vsyncpa [#allocation7], 1
    %s620 = scalar_lea.sflag [#allocation7], 1
    %621 = vsyncpa %s620, 1
    %622 = vsyncpa [#allocation10], 1
    %s623 = scalar_lea.sflag [#allocation10], 1
    %624 = vsyncpa %s623, 1
    %625 = vsyncpa [#allocation8], 1
    %s626 = scalar_lea.sflag [#allocation8], 1
    %627 = vsyncpa %s626, 1
    %628 = vsyncpa [#allocation14], 1
    %s629 = scalar_lea.sflag [#allocation14], 1
    %630 = vsyncpa %s629, 1

</llo_original>
